<compile_context>
chip_gen: v7x
topology: tpu7x:2x2x1
jax: 0.10.0
libtpu: 0.0.40
codegen_flags: <defaults>
</compile_context>

<pallas_src>
import jax
import jax.numpy as jnp
from jax.experimental import pallas as pl
from jax.experimental.pallas import tpu as pltpu  # noqa: F401  (TPU backend)

# Small shapes consistent with annotate_args([4, -1, -1], float32):
# batch = 4, picked dynamic dims (8, 128) so the block is (sublane, lane)
# aligned -> unmasked vst, no relayout.
IN_SHAPE = (4, 8, 128)


def _squeeze_kernel(a_ref, o_ref):
    # No unit dims to drop -> squeeze is the identity: one full-tile vreg copy.
    o_ref[...] = a_ref[...]


def squeeze_no_unit_dim(a: jax.Array) -> jax.Array:
    # torch.squeeze output shape = input shape with size-1 dims removed.
    out_shape = tuple(d for d in a.shape if d != 1)
    # NoUnitDim contract: nothing to remove -> identity.
    assert out_shape == a.shape, "SqueezeNoUnitDimModule expects no size-1 dims"

    return pl.pallas_call(
        _squeeze_kernel,
        out_shape=jax.ShapeDtypeStruct(out_shape, a.dtype),
        # Single grid point, full-extent blocks: the whole (4, 8, 128) f32
        # tensor is 16 KiB, far below VMEM on every generation, so no grid
        # tiling / dimension_semantics / multi-buffering is warranted.
        in_specs=[pl.BlockSpec(a.shape, lambda: (0,) * a.ndim)],
        out_specs=pl.BlockSpec(out_shape, lambda: (0,) * len(out_shape)),
    )(a)


if __name__ == "__main__":
    key = jax.random.PRNGKey(0)
    a = jax.random.normal(key, IN_SHAPE, dtype=jnp.float32)

    out = squeeze_no_unit_dim(a)
    jax.block_until_ready(out)

    # Reference: torch.squeeze semantics == jnp.squeeze (identity here).
    ref = jnp.squeeze(a)
    assert out.shape == ref.shape == IN_SHAPE
    assert jnp.array_equal(out, ref)

    print("KERNEL_OK")
</pallas_src>

<mosaic_0001>
module attributes {stable_mosaic.version = 11 : i64} {
  func.func @_squeeze_kernel(%arg0: memref<4x8x128xf32, #tpu.memory_space<vmem>>, %arg1: memref<4x8x128xf32, #tpu.memory_space<vmem>>) attributes {dimension_semantics = [], scalar_prefetch = 0 : i64, scratch_operands = 0 : i64, tpu.core_type = #tpu.core_type<tc>} {
    %c0 = arith.constant 0 : index
    %c0_0 = arith.constant 0 : index
    %c0_1 = arith.constant 0 : index
    %0 = vector.load %arg0[%c0, %c0_0, %c0_1] : memref<4x8x128xf32, #tpu.memory_space<vmem>>, vector<4x8x128xf32>
    %c0_2 = arith.constant 0 : index
    %c0_3 = arith.constant 0 : index
    %c0_4 = arith.constant 0 : index
    %1 = vector.load %arg1[%c0_2, %c0_3, %c0_4] : memref<4x8x128xf32, #tpu.memory_space<vmem>>, vector<4x8x128xf32>
    tpu.vector_store %arg1[%c0_2, %c0_3, %c0_4], %0 {strides = array<i32>} : memref<4x8x128xf32, #tpu.memory_space<vmem>>, vector<4x8x128xf32>,
    return
  }
}

</mosaic_0001>

<llo_original>
// kernel: tpu_custom_call.1
$region0: #{tpu_custom_call.1}
  #allocation0 [shape = 'u32[]', space=smem, size = 0x4, offset = 0x4, fixed_abs, tag = 'smem constant byte address 0x4 - core index']
  #allocation1 [shape = 'u32[144,128]{1,0:T(1,128)}', space=vmem, size = 0x12000, scoped, tag = 'internal scratch']
  %s0 = inlined_call_operand.hbm [shape: f32[4,8,128], index: 0, kind: input, shape index: {}]
  %s1 = inlined_call_operand.hbm [shape: f32[4,8,128], index: 1, kind: output, shape index: {}]
  %s2 = sld [smem:[#allocation0]]
  $region18: #{tpu_custom_call.1} parent=0
    _
  %s4 = ssub.s32 1, %s2
  %s5 = scalar_select 0, %s4, %s2
  $region1: #{tpu_custom_call.1} parent=0
    #allocation2 [shape = 'u8[16384]{0}', space=vmem, size = 0x4000, scoped, tag = 'input window, operand 0, single buffered']
    #allocation3 [shape = 's32[1]{0}', space=sflag, size = 0x4, scoped, tag = 'scoped memory for tpu_custom_call.1']
    #allocation4 [shape = 's32[1]{0}', space=sflag, size = 0x4, scoped, tag = 'scoped memory for tpu_custom_call.1']
    #allocation5 [shape = 'u8[16384]{0}', space=vmem, size = 0x4000, scoped, tag = 'output window, operand 0, single buffered']
    %6 = vsyncpa [#allocation3], 0
    %7 = vsyncpa [#allocation4], 0
    // Predicated region
    $region2: #{tpu_custom_call.1} parent=1 // pred_check
      _
    $region3: #{tpu_custom_call.1} parent=1 // pred_check_branch
      %9 = sbr.rel (0) target = $region5
    $region4: #{tpu_custom_call.1} parent=1 // pred_region
      %s11 = ssub.s32 512, 512
      %12 = vsyncadd [#allocation3], %s11
      %s13 = sshll.u32 [#allocation2], 4
      %s14 = int_to_ptr.vmem [resolvable:$true] %s13
      %19 = dma.hbm_to_vmem [thread:$0]  %s0, 512, %s14, [#allocation3], 128, 128, 8
    $region5: #{tpu_custom_call.1} parent=1 // pred_fallthru
      _
    // Predicated region
    $region6: #{tpu_custom_call.1} parent=1 // pred_check
      _
    $region7: #{tpu_custom_call.1} parent=1 // pred_check_branch
      %21 = sbr.rel (0) target = $region9
    $region8: #{tpu_custom_call.1} parent=1 // pred_region
      %22 = dma.done [#allocation3], 512
    $region9: #{tpu_custom_call.1} parent=1 // pred_fallthru
      _
    %v23 = vld [vmem:[#allocation2] sm:$0xff]
    %v24 = vld [vmem:[#allocation2 + $0x8] sm:$0xff]
    %v25 = vld [vmem:[#allocation2 + $0x10] sm:$0xff]
    %v26 = vld [vmem:[#allocation2 + $0x18] sm:$0xff]
    %27 = vst [vmem:[#allocation5] sm:$0xff] %v23
    %28 = vst [vmem:[#allocation5 + $0x8] sm:$0xff] %v24
    %29 = vst [vmem:[#allocation5 + $0x10] sm:$0xff] %v25
    %30 = vst [vmem:[#allocation5 + $0x18] sm:$0xff] %v26
    // Predicated region
    $region10: #{tpu_custom_call.1} parent=1 // pred_check
      _
    $region11: #{tpu_custom_call.1} parent=1 // pred_check_branch
      %32 = sbr.rel (0) target = $region13
    $region12: #{tpu_custom_call.1} parent=1 // pred_region
      %s34 = ssub.s32 512, 512
      %35 = vsyncadd [#allocation4], %s34
      %s36 = sshll.u32 [#allocation5], 4
      %s37 = int_to_ptr.vmem [resolvable:$true] %s36
      %42 = dma.vmem_to_hbm [thread:$0]  %s37, 512, %s1, [#allocation4], 128, 128, 8
    $region13: #{tpu_custom_call.1} parent=1 // pred_fallthru
      _
    // Predicated region
    $region14: #{tpu_custom_call.1} parent=1 // pred_check
      _
    $region15: #{tpu_custom_call.1} parent=1 // pred_check_branch
      %44 = sbr.rel (0) target = $region17
    $region16: #{tpu_custom_call.1} parent=1 // pred_region
      %45 = dma.done [#allocation4], 512
    $region17: #{tpu_custom_call.1} parent=1 // pred_fallthru
      _
    %46 = vsyncpa [#allocation3], 1
    %47 = vsyncpa [#allocation4], 1

</llo_original>
